<compile_context>
chip_gen: v6e
topology: v6e:2x2x1
jax: 0.10.0
libtpu: 0.0.40
codegen_flags: <defaults>
</compile_context>

<pallas_src>
import functools
import math

import jax
import jax.numpy as jnp
from jax.experimental import pallas as pl
from jax.experimental.pallas import tpu as pltpu


def _round_up(n, m):
    return ((n + m - 1) // m) * m


def _discrete_latent_kernel(x_ref, g_ref, w1_ref, b1_ref, w2_ref, b2_ref,
                            logits_ref, latents_ref, *,
                            n_categoricals, n_classes, compute_dtype):
    x = x_ref[...]
    w1 = w1_ref[...]
    w2 = w2_ref[...]
    if compute_dtype != jnp.float32:
        x, w1, w2 = x.astype(compute_dtype), w1.astype(compute_dtype), w2.astype(compute_dtype)

    # MLP hot path on the MXU, f32 accumulation.
    h = jnp.dot(x, w1, preferred_element_type=jnp.float32) + b1_ref[...]
    h = jnp.maximum(h, 0.0)                                           # ReLU
    if compute_dtype != jnp.float32:
        h = h.astype(compute_dtype)
    logits = jnp.dot(h, w2, preferred_element_type=jnp.float32) + b2_ref[...]
    logits_ref[...] = logits.astype(logits_ref.dtype)                 # (bb, K*C)

    # Gumbel-max categorical sampling. Forward value of
    #   one_hot + probs - probs.detach()  ==  one_hot,
    # so the softmax/probs path is dead compute and has been removed entirely.
    bb = logits.shape[0]
    K, C = n_categoricals, n_classes
    z = (logits + g_ref[...]).reshape(bb, K, C)                       # logits + Gumbel noise
    z_max = jnp.max(z, axis=-1, keepdims=True)
    cls = jax.lax.broadcasted_iota(jnp.int32, z.shape, 2)
    # First index attaining the max -> exactly one class set even on float ties,
    # matching torch.distributions.OneHotCategorical.sample().
    first = jnp.min(jnp.where(z >= z_max, cls, C), axis=-1, keepdims=True)
    one_hot = (cls == first).astype(latents_ref.dtype)
    latents_ref[...] = one_hot.reshape(bb, K * C)


def discrete_latent_dist(x, params, key, n_categoricals, n_classes,
                         *, block_b=256, compute_dtype=jnp.float32):
    """x: (..., in_dim) float32. Returns (logits, latents), each (..., K*C)."""
    w1, b1, w2, b2 = params
    lead = x.shape[:-1]
    in_dim = x.shape[-1]
    hidden = w1.shape[1]
    out_dim = n_categoricals * n_classes
    assert w2.shape == (hidden, out_dim)

    B = int(math.prod(lead)) if lead else 1
    x2 = x.reshape(B, in_dim).astype(jnp.float32)
    b1 = b1.reshape(1, hidden).astype(jnp.float32)
    b2 = b2.reshape(1, out_dim).astype(jnp.float32)

    # Host-side Gumbel noise (deterministic per key); per-row, so batch tiling is safe.
    gumbel = jax.random.gumbel(key, (B, out_dim), jnp.float32)

    # Batch blocking: multiples of 8 sublanes, capped (v7x-friendly VMEM footprint).
    bb = max(8, min(block_b, _round_up(B, 8)))
    padded_B = _round_up(B, bb)
    if padded_B != B:
        pad = padded_B - B
        x2 = jnp.pad(x2, ((0, pad), (0, 0)))
        gumbel = jnp.pad(gumbel, ((0, pad), (0, 0)))
    grid = (padded_B // bb,)

    kernel = functools.partial(_discrete_latent_kernel,
                               n_categoricals=n_categoricals,
                               n_classes=n_classes,
                               compute_dtype=compute_dtype)

    logits, latents = pl.pallas_call(
        kernel,
        out_shape=(jax.ShapeDtypeStruct((padded_B, out_dim), jnp.float32),
                   jax.ShapeDtypeStruct((padded_B, out_dim), jnp.float32)),
        grid=grid,
        in_specs=[
            pl.BlockSpec((bb, in_dim),       lambda i: (i, 0)),   # x     (streamed)
            pl.BlockSpec((bb, out_dim),      lambda i: (i, 0)),   # noise (streamed)
            pl.BlockSpec((in_dim, hidden),   lambda i: (0, 0)),   # w1    (resident)
            pl.BlockSpec((1, hidden),        lambda i: (0, 0)),   # b1    (resident)
            pl.BlockSpec((hidden, out_dim),  lambda i: (0, 0)),   # w2    (resident)
            pl.BlockSpec((1, out_dim),       lambda i: (0, 0)),   # b2    (resident)
        ],
        out_specs=(
            pl.BlockSpec((bb, out_dim), lambda i: (i, 0)),
            pl.BlockSpec((bb, out_dim), lambda i: (i, 0)),
        ),
        compiler_params=pltpu.CompilerParams(
            dimension_semantics=("parallel",)),   # megacore split over batch on v7x
    )(x2, gumbel, w1.astype(jnp.float32), b1, w2.astype(jnp.float32), b2)

    logits = logits[:B].reshape(lead + (out_dim,))
    latents = latents[:B].reshape(lead + (out_dim,))
    return logits, latents


if __name__ == "__main__":
    # Small shapes consistent with the module: in_dim=32, hidden=32, 4 categoricals x 32 classes.
    B, in_dim, hidden, K, C = 8, 32, 32, 4, 32
    out_dim = K * C

    key = jax.random.PRNGKey(0)
    kx, k1, k2, k3, k4, ksample = jax.random.split(key, 6)
    x = jax.random.normal(kx, (B, in_dim), jnp.float32)

    # Deterministic parameter init (PyTorch Linear-style uniform bounds).
    lim1 = 1.0 / (in_dim ** 0.5)
    w1 = jax.random.uniform(k1, (in_dim, hidden), jnp.float32, -lim1, lim1)
    b1 = jax.random.uniform(k2, (1, hidden), jnp.float32, -lim1, lim1)
    lim2 = 1.0 / (hidden ** 0.5)
    w2 = jax.random.uniform(k3, (hidden, out_dim), jnp.float32, -lim2, lim2)
    b2 = jax.random.uniform(k4, (1, out_dim), jnp.float32, -lim2, lim2)

    logits, latents = discrete_latent_dist(x, (w1, b1, w2, b2), ksample,
                                           n_categoricals=K, n_classes=C)
    jax.block_until_ready((logits, latents))

    # Shape checks (match PyTorch outputs).
    assert logits.shape == (B, out_dim) and latents.shape == (B, out_dim)

    # Latents are exactly one-hot per categorical.
    lat = latents.reshape(B, K, C)
    assert bool(jnp.all(jnp.sum(lat, axis=-1) == 1.0))
    assert bool(jnp.all((lat == 0.0) | (lat == 1.0)))

    # Deterministic part (logits) matches a plain-JAX reference.
    ref_logits = jnp.maximum(x @ w1 + b1, 0.0) @ w2 + b2
    assert bool(jnp.allclose(logits, ref_logits, atol=1e-4, rtol=1e-4))

    # Sampling check: the sampled class is the Gumbel-max of the kernel's own logits.
    g = jax.random.gumbel(ksample, (B, out_dim), jnp.float32)
    ref_choice = jnp.argmax((logits + g).reshape(B, K, C), axis=-1)
    assert bool(jnp.all(jnp.argmax(lat, axis=-1) == ref_choice))

    print("KERNEL_OK")
</pallas_src>

<mosaic_0001>
module attributes {stable_mosaic.version = 11 : i64} {
  func.func @_discrete_latent_kernel(%arg0: i32, %arg1: memref<8x32xf32, #tpu.memory_space<vmem>>, %arg2: memref<8x128xf32, #tpu.memory_space<vmem>>, %arg3: memref<32x32xf32, #tpu.memory_space<vmem>>, %arg4: memref<1x32xf32, #tpu.memory_space<vmem>>, %arg5: memref<32x128xf32, #tpu.memory_space<vmem>>, %arg6: memref<1x128xf32, #tpu.memory_space<vmem>>, %arg7: memref<8x128xf32, #tpu.memory_space<vmem>>, %arg8: memref<8x128xf32, #tpu.memory_space<vmem>>) attributes {dimension_semantics = [#tpu.dimension_semantics<parallel>], iteration_bounds = array<i64: 1>, scalar_prefetch = 0 : i64, scratch_operands = 0 : i64, tpu.core_type = #tpu.core_type<tc>, window_params = [{transform_indices = @transform_0, window_bounds = array<i64: 8, 32>}, {transform_indices = @transform_1, window_bounds = array<i64: 8, 128>}, {pipeline_mode = #tpu.pipeline_mode<synchronous>, transform_indices = @transform_2, window_bounds = array<i64: 32, 32>}, {pipeline_mode = #tpu.pipeline_mode<synchronous>, transform_indices = @transform_3, window_bounds = array<i64: 1, 32>}, {pipeline_mode = #tpu.pipeline_mode<synchronous>, transform_indices = @transform_4, window_bounds = array<i64: 32, 128>}, {pipeline_mode = #tpu.pipeline_mode<synchronous>, transform_indices = @transform_5, window_bounds = array<i64: 1, 128>}, {transform_indices = @transform_6, window_bounds = array<i64: 8, 128>}, {transform_indices = @transform_7, window_bounds = array<i64: 8, 128>}]} {
    %c0 = arith.constant 0 : index
    %c0_0 = arith.constant 0 : index
    %0 = vector.load %arg1[%c0, %c0_0] : memref<8x32xf32, #tpu.memory_space<vmem>>, vector<8x32xf32>
    %c0_1 = arith.constant 0 : index
    %c0_2 = arith.constant 0 : index
    %1 = vector.load %arg3[%c0_1, %c0_2] : memref<32x32xf32, #tpu.memory_space<vmem>>, vector<32x32xf32>
    %c0_3 = arith.constant 0 : index
    %c0_4 = arith.constant 0 : index
    %2 = vector.load %arg5[%c0_3, %c0_4] : memref<32x128xf32, #tpu.memory_space<vmem>>, vector<32x128xf32>
    %cst = arith.constant dense<0.000000e+00> : vector<8x32xf32>
    %3 = tpu.matmul %0, %1, %cst {dimension_numbers = #tpu.dot_dimension_numbers<[1], [0], [0], [1], [0, 0, 1, 1], [], []>} : vector<8x32xf32>, vector<32x32xf32>, vector<8x32xf32> -> vector<8x32xf32>
    %c0_5 = arith.constant 0 : index
    %c0_6 = arith.constant 0 : index
    %4 = vector.load %arg4[%c0_5, %c0_6] : memref<1x32xf32, #tpu.memory_space<vmem>>, vector<1x32xf32>
    %5 = vector.broadcast %4 : vector<1x32xf32> to vector<8x32xf32>
    %6 = arith.addf %3, %5 : vector<8x32xf32>
    %cst_7 = arith.constant 0.000000e+00 : f32
    %7 = vector.broadcast %cst_7 : f32 to vector<8x32xf32>
    %8 = arith.maximumf %6, %7 : vector<8x32xf32>
    %cst_8 = arith.constant dense<0.000000e+00> : vector<8x128xf32>
    %9 = tpu.matmul %8, %2, %cst_8 {dimension_numbers = #tpu.dot_dimension_numbers<[1], [0], [0], [1], [0, 0, 1, 1], [], []>} : vector<8x32xf32>, vector<32x128xf32>, vector<8x128xf32> -> vector<8x128xf32>
    %c0_9 = arith.constant 0 : index
    %c0_10 = arith.constant 0 : index
    %10 = vector.load %arg6[%c0_9, %c0_10] : memref<1x128xf32, #tpu.memory_space<vmem>>, vector<1x128xf32>
    %11 = vector.broadcast %10 : vector<1x128xf32> to vector<8x128xf32>
    %12 = arith.addf %9, %11 : vector<8x128xf32>
    %c0_11 = arith.constant 0 : index
    %c0_12 = arith.constant 0 : index
    %13 = vector.load %arg7[%c0_11, %c0_12] : memref<8x128xf32, #tpu.memory_space<vmem>>, vector<8x128xf32>
    tpu.vector_store %arg7[%c0_11, %c0_12], %12 {strides = array<i32>} : memref<8x128xf32, #tpu.memory_space<vmem>>, vector<8x128xf32>,
    %c0_13 = arith.constant 0 : index
    %c0_14 = arith.constant 0 : index
    %14 = vector.load %arg2[%c0_13, %c0_14] : memref<8x128xf32, #tpu.memory_space<vmem>>, vector<8x128xf32>
    %15 = arith.addf %12, %14 : vector<8x128xf32>
    %16 = vector.shape_cast %15 : vector<8x128xf32> to vector<8x4x32xf32>
    %cst_15 = arith.constant dense<0xFF800000> : vector<8x4xf32>
    %17 = vector.multi_reduction <maximumf>, %16, %cst_15 [2] : vector<8x4x32xf32> to vector<8x4xf32>
    %18 = vector.shape_cast %17 : vector<8x4xf32> to vector<8x4x1xf32>
    %19 = tpu.iota {dimensions = array<i32: 2>} : vector<8x4x32xi32>
    %20 = vector.broadcast %18 : vector<8x4x1xf32> to vector<8x4x32xf32>
    %21 = arith.cmpf oge, %16, %20 : vector<8x4x32xf32>
    %c32_i32 = arith.constant 32 : i32
    %22 = vector.broadcast %c32_i32 : i32 to vector<8x4x32xi32>
    %23 = arith.select %21, %19, %22 : vector<8x4x32xi1>, vector<8x4x32xi32>
    %cst_16 = arith.constant dense<2147483647> : vector<8x4xi32>
    %24 = vector.multi_reduction <minsi>, %23, %cst_16 [2] : vector<8x4x32xi32> to vector<8x4xi32>
    %25 = vector.shape_cast %24 : vector<8x4xi32> to vector<8x4x1xi32>
    %26 = vector.broadcast %25 : vector<8x4x1xi32> to vector<8x4x32xi32>
    %27 = arith.cmpi eq, %19, %26 : vector<8x4x32xi32>
    %28 = arith.extui %27 : vector<8x4x32xi1> to vector<8x4x32xi32>
    %29 = arith.sitofp %28 : vector<8x4x32xi32> to vector<8x4x32xf32>
    %30 = vector.shape_cast %29 : vector<8x4x32xf32> to vector<8x128xf32>
    %c0_17 = arith.constant 0 : index
    %c0_18 = arith.constant 0 : index
    %31 = vector.load %arg8[%c0_17, %c0_18] : memref<8x128xf32, #tpu.memory_space<vmem>>, vector<8x128xf32>
    tpu.vector_store %arg8[%c0_17, %c0_18], %30 {strides = array<i32>} : memref<8x128xf32, #tpu.memory_space<vmem>>, vector<8x128xf32>,
    return
  }
  func.func @transform_0(%arg0: i32) -> (i32, i32) {
    %c0_i32 = arith.constant 0 : i32
    %c0_i32_0 = arith.constant 0 : i32
    return %arg0, %c0_i32 : i32, i32
  }
  func.func @transform_1(%arg0: i32) -> (i32, i32) {
    %c0_i32 = arith.constant 0 : i32
    %c0_i32_0 = arith.constant 0 : i32
    return %arg0, %c0_i32 : i32, i32
  }
  func.func @transform_2(%arg0: i32) -> (i32, i32) {
    %c0_i32 = arith.constant 0 : i32
    %c0_i32_0 = arith.constant 0 : i32
    %c0_i32_1 = arith.constant 0 : i32
    return %c0_i32, %c0_i32_0 : i32, i32
  }
  func.func @transform_3(%arg0: i32) -> (i32, i32) {
    %c0_i32 = arith.constant 0 : i32
    %c0_i32_0 = arith.constant 0 : i32
    %c0_i32_1 = arith.constant 0 : i32
    return %c0_i32, %c0_i32_0 : i32, i32
  }
  func.func @transform_4(%arg0: i32) -> (i32, i32) {
    %c0_i32 = arith.constant 0 : i32
    %c0_i32_0 = arith.constant 0 : i32
    %c0_i32_1 = arith.constant 0 : i32
    return %c0_i32, %c0_i32_0 : i32, i32
  }
  func.func @transform_5(%arg0: i32) -> (i32, i32) {
    %c0_i32 = arith.constant 0 : i32
    %c0_i32_0 = arith.constant 0 : i32
    %c0_i32_1 = arith.constant 0 : i32
    return %c0_i32, %c0_i32_0 : i32, i32
  }
  func.func @transform_6(%arg0: i32) -> (i32, i32) {
    %c0_i32 = arith.constant 0 : i32
    %c0_i32_0 = arith.constant 0 : i32
    return %arg0, %c0_i32 : i32, i32
  }
  func.func @transform_7(%arg0: i32) -> (i32, i32) {
    %c0_i32 = arith.constant 0 : i32
    %c0_i32_0 = arith.constant 0 : i32
    return %arg0, %c0_i32 : i32, i32
  }
}

</mosaic_0001>

<llo_original>
// kernel: tpu_custom_call.1
$region0: #{tpu_custom_call.1}
  #allocation0 [shape = 'u32[]', space=smem, size = 0x4, offset = 0x4, fixed_abs, tag = 'smem constant byte address 0x4 - core index']
  #allocation1 [shape = 'u32[144,128]{1,0:T(1,128)}', space=vmem, size = 0x12000, scoped, tag = 'internal scratch']
  %s0 = inlined_call_operand.hbm [shape: f32[8,32], index: 0, kind: input, shape index: {}]
  %s1 = inlined_call_operand.hbm [shape: f32[8,128], index: 1, kind: input, shape index: {}]
  %s2 = inlined_call_operand.hbm [shape: f32[32,32], index: 2, kind: input, shape index: {}]
  %s3 = inlined_call_operand.vmem [shape: f32[1,32], index: 3, kind: input, shape index: {}]
  %s4 = inlined_call_operand.hbm [shape: f32[32,128], index: 4, kind: input, shape index: {}]
  %s5 = inlined_call_operand.vmem [shape: f32[1,128], index: 5, kind: input, shape index: {}]
  %s6 = inlined_call_operand.hbm [shape: f32[8,128], index: 6, kind: output, shape index: {0}]
  %s7 = inlined_call_operand.hbm [shape: f32[8,128], index: 7, kind: output, shape index: {1}]
  %8 = xla_tuple %s6, %s7
  %s9 = sld [smem:[#allocation0]]
  $region58: #{tpu_custom_call.1} parent=0
    _
  %s11 = ssub.s32 1, %s9
  %s12 = scalar_select 0, %s11, %s9
  $region1: #{tpu_custom_call.1} parent=0
    #allocation2 [shape = 'u8[4096]{0}', space=vmem, size = 0x1000, scoped, tag = 'input window, operand 0, single buffered']
    #allocation3 [shape = 's32[1]{0}', space=sflag, size = 0x4, scoped, tag = 'scoped memory for tpu_custom_call.1']
    #allocation4 [shape = 's32[1]{0}', space=sflag, size = 0x4, scoped, tag = 'scoped memory for tpu_custom_call.1']
    #allocation5 [shape = 'u8[4096]{0}', space=vmem, size = 0x1000, scoped, tag = 'input window, operand 1, single buffered']
    #allocation6 [shape = 's32[1]{0}', space=sflag, size = 0x4, scoped, tag = 'scoped memory for tpu_custom_call.1']
    #allocation7 [shape = 'u8[16384]{0}', space=vmem, size = 0x4000, scoped, tag = 'input window, operand 2, single buffered']
    #allocation8 [shape = 'u8[16384]{0}', space=vmem, size = 0x4000, scoped, tag = 'input window, operand 4, single buffered']
    #allocation9 [shape = 's32[1]{0}', space=sflag, size = 0x4, scoped, tag = 'scoped memory for tpu_custom_call.1']
    #allocation10 [shape = 'u8[4096]{0}', space=vmem, size = 0x1000, scoped, tag = 'output window, operand 0, single buffered']
    #allocation11 [shape = 'u8[4096]{0}', space=vmem, size = 0x1000, scoped, tag = 'output window, operand 1, single buffered']
    #allocation12 [shape = 's32[1]{0}', space=sflag, size = 0x4, scoped, tag = 'scoped memory for tpu_custom_call.1']
    %13 = vsyncpa [#allocation3], 0
    %14 = vsyncpa [#allocation6], 0
    %15 = vsyncpa [#allocation9], 0
    %16 = vsyncpa [#allocation4], 0
    %17 = vsyncpa [#allocation12], 0
    // Predicated region
    $region2: #{tpu_custom_call.1} parent=1 // pred_check
      _
    $region3: #{tpu_custom_call.1} parent=1 // pred_check_branch
      %19 = sbr.rel (0) target = $region5
    $region4: #{tpu_custom_call.1} parent=1 // pred_region
      %s21 = ssub.s32 128, 128
      %22 = vsyncadd [#allocation3], %s21
      %s24 = sshll.u32 [#allocation2], 4
      %s25 = int_to_ptr.vmem [resolvable:$true] %s24
      %27 = dma.hbm_to_vmem [thread:$0]  %s0, 128, %s25, [#allocation3]
    $region5: #{tpu_custom_call.1} parent=1 // pred_fallthru
      _
    // Predicated region
    $region6: #{tpu_custom_call.1} parent=1 // pred_check
      _
    $region7: #{tpu_custom_call.1} parent=1 // pred_check_branch
      %29 = sbr.rel (0) target = $region9
    $region8: #{tpu_custom_call.1} parent=1 // pred_region
      %s31 = ssub.s32 128, 128
      %32 = vsyncadd [#allocation6], %s31
      %s34 = sshll.u32 [#allocation5], 4
      %s35 = int_to_ptr.vmem [resolvable:$true] %s34
      %37 = dma.hbm_to_vmem [thread:$0]  %s1, 128, %s35, [#allocation6]
    $region9: #{tpu_custom_call.1} parent=1 // pred_fallthru
      _
    // Predicated region
    $region10: #{tpu_custom_call.1} parent=1 // pred_check
      _
    $region11: #{tpu_custom_call.1} parent=1 // pred_check_branch
      %39 = sbr.rel (0) target = $region13
    $region12: #{tpu_custom_call.1} parent=1 // pred_region
      %s41 = ssub.s32 512, 512
      %42 = vsyncadd [#allocation6], %s41
      %s43 = sshll.u32 [#allocation7], 4
      %s44 = int_to_ptr.vmem [resolvable:$true] %s43
      %49 = dma.hbm_to_vmem [thread:$0]  %s2, 512, %s44, [#allocation6], 128, 128, 8
    $region13: #{tpu_custom_call.1} parent=1 // pred_fallthru
      _
    // Predicated region
    $region14: #{tpu_custom_call.1} parent=1 // pred_check
      _
    $region15: #{tpu_custom_call.1} parent=1 // pred_check_branch
      %51 = sbr.rel (0) target = $region17
    $region16: #{tpu_custom_call.1} parent=1 // pred_region
      _
    $region17: #{tpu_custom_call.1} parent=1 // pred_fallthru
      _
    // Predicated region
    $region18: #{tpu_custom_call.1} parent=1 // pred_check
      _
    $region19: #{tpu_custom_call.1} parent=1 // pred_check_branch
      %53 = sbr.rel (0) target = $region21
    $region20: #{tpu_custom_call.1} parent=1 // pred_region
      %s55 = ssub.s32 512, 512
      %56 = vsyncadd [#allocation9], %s55
      %s57 = sshll.u32 [#allocation8], 4
      %s58 = int_to_ptr.vmem [resolvable:$true] %s57
      %63 = dma.hbm_to_vmem [thread:$0]  %s4, 512, %s58, [#allocation9], 128, 128, 8
    $region21: #{tpu_custom_call.1} parent=1 // pred_fallthru
      _
    // Predicated region
    $region22: #{tpu_custom_call.1} parent=1 // pred_check
      _
    $region23: #{tpu_custom_call.1} parent=1 // pred_check_branch
      %65 = sbr.rel (0) target = $region25
    $region24: #{tpu_custom_call.1} parent=1 // pred_region
      _
    $region25: #{tpu_custom_call.1} parent=1 // pred_fallthru
      _
    // Predicated region
    $region26: #{tpu_custom_call.1} parent=1 // pred_check
      _
    $region27: #{tpu_custom_call.1} parent=1 // pred_check_branch
      %67 = sbr.rel (0) target = $region29
    $region28: #{tpu_custom_call.1} parent=1 // pred_region
      %68 = dma.done [#allocation3], 128
    $region29: #{tpu_custom_call.1} parent=1 // pred_fallthru
      _
    // Predicated region
    $region30: #{tpu_custom_call.1} parent=1 // pred_check
      _
    $region31: #{tpu_custom_call.1} parent=1 // pred_check_branch
      %70 = sbr.rel (0) target = $region33
    $region32: #{tpu_custom_call.1} parent=1 // pred_region
      %71 = dma.done [#allocation6], 128
    $region33: #{tpu_custom_call.1} parent=1 // pred_fallthru
      _
    // Predicated region
    $region34: #{tpu_custom_call.1} parent=1 // pred_check
      _
    $region35: #{tpu_custom_call.1} parent=1 // pred_check_branch
      %73 = sbr.rel (0) target = $region37
    $region36: #{tpu_custom_call.1} parent=1 // pred_region
      %74 = dma.done [#allocation6], 512
    $region37: #{tpu_custom_call.1} parent=1 // pred_fallthru
      _
    // Predicated region
    $region38: #{tpu_custom_call.1} parent=1 // pred_check
      _
    $region39: #{tpu_custom_call.1} parent=1 // pred_check_branch
      %76 = sbr.rel (0) target = $region41
    $region40: #{tpu_custom_call.1} parent=1 // pred_region
      %77 = dma.done [#allocation9], 512
    $region41: #{tpu_custom_call.1} parent=1 // pred_fallthru
      _
    %v78 = vld [vmem:[#allocation2] sm:$0xff]
    %v79 = vld [vmem:[#allocation7] sm:$0xff]
    %v80 = vld [vmem:[#allocation7 + $0x8] sm:$0xff]
    %v81 = vld [vmem:[#allocation7 + $0x10] sm:$0xff]
    %v82 = vld [vmem:[#allocation7 + $0x18] sm:$0xff]
    %v83 = vld [vmem:[#allocation8] sm:$0xff]
    %v84 = vld [vmem:[#allocation8 + $0x8] sm:$0xff]
    %v85 = vld [vmem:[#allocation8 + $0x10] sm:$0xff]
    %v86 = vld [vmem:[#allocation8 + $0x18] sm:$0xff]
    %v87 = vld [vmem:[%s3] sm:$0x1]
    %v89 = vlaneseq
    %v90 = vshrl.u32 %v89, 7
    %v91 = vsub.s32 0, %v90
    %v92 = vrot.slane %v87, %v91
    %vm94 = vcmask 261120
    %v96 = vsel %vm94, %v78, 0
    %98 = vmatprep.subr.mxu0 0.0
    %99 = vmatpush1.msra.mxu0 0.0
    %100 = vmatprep.subr.mxu0 0.0
    %101 = vmatpush1.msra.mxu0 0.0
    %102 = vmatprep.subr.mxu0 0.0
    %103 = vmatpush1.msra.mxu0 0.0
    %104 = vmatprep.subr.mxu0 0.0
    %105 = vmatpush1.msra.mxu0 0.0
    %106 = vmatprep.subr.mxu0 0.0
    %107 = vmatpush1.msra.mxu0 0.0
    %108 = vmatprep.subr.mxu0 0.0
    %109 = vmatpush1.msra.mxu0 0.0
    %110 = vmatprep.subr.mxu0 0.0
    %111 = vmatpush1.msra.mxu0 0.0
    %112 = vmatprep.subr.mxu0 0.0
    %113 = vmatpush1.msra.mxu0 0.0
    %114 = vmatprep.subr.mxu0 0.0
    %115 = vmatpush1.msra.mxu0 0.0
    %116 = vmatprep.subr.mxu0 0.0
    %117 = vmatpush1.msra.mxu0 0.0
    %118 = vmatprep.subr.mxu0 0.0
    %119 = vmatpush1.msra.mxu0 0.0
    %120 = vmatprep.subr.mxu0 0.0
    %121 = vmatpush1.msra.mxu0 0.0
    %122 = vmatprep.subr.mxu0 0.0
    %123 = vmatpush1.msra.mxu0 %v82
    %124 = vmatprep.subr.mxu0 0.0
    %125 = vmatpush1.msra.mxu0 %v81
    %126 = vmatprep.subr.mxu0 0.0
    %127 = vmatpush1.msra.mxu0 %v80
    %128 = vmatprep.subr.mxu0 0.0
    %129 = vmatpush1.msra.mxu0 %v79
    %130 = vmatprep.subr.mxu0 0.0
    %131 = vmatpush2.msra.mxu0 0.0
    %132 = vmatprep.subr.mxu0 0.0
    %133 = vmatpush2.msra.mxu0 0.0
    %134 = vmatprep.subr.mxu0 0.0
    %135 = vmatpush2.msra.mxu0 0.0
    %136 = vmatprep.subr.mxu0 0.0
    %137 = vmatpush2.msra.mxu0 0.0
    %138 = vmatprep.subr.mxu0 0.0
    %139 = vmatpush2.msra.mxu0 0.0
    %140 = vmatprep.subr.mxu0 0.0
    %141 = vmatpush2.msra.mxu0 0.0
    %142 = vmatprep.subr.mxu0 0.0
    %143 = vmatpush2.msra.mxu0 0.0
    %144 = vmatprep.subr.mxu0 0.0
    %145 = vmatpush2.msra.mxu0 0.0
    %146 = vmatprep.subr.mxu0 0.0
    %147 = vmatpush2.msra.mxu0 0.0
    %148 = vmatprep.subr.mxu0 0.0
    %149 = vmatpush2.msra.mxu0 0.0
    %150 = vmatprep.subr.mxu0 0.0
    %151 = vmatpush2.msra.mxu0 0.0
    %152 = vmatprep.subr.mxu0 0.0
    %153 = vmatpush2.msra.mxu0 0.0
    %154 = vmatprep.subr.mxu0 0.0
    %155 = vmatpush2.msra.mxu0 0.0
    %156 = vmatprep.subr.mxu0 0.0
    %157 = vmatpush2.msra.mxu0 0.0
    %158 = vmatprep.subr.mxu0 0.0
    %159 = vmatpush2.msra.mxu0 0.0
    %160 = vmatprep.subr.mxu0 0.0
    %161 = vmatpush2.msra.mxu0 0.0
    %162 = vmatprep.mubr.f32.mxu0 0.0
    %163 = vmatmul.mubr.f32.gmra.mxu0 %v96
    %v164 = vpop.f32.mrf.mxu0
    %v165 = vadd.f32 %v92, %v164
    %v166 = vpop.f32.mrf.mxu0
    %167 = vdwg.mxu0
    %v168 = vmax.f32 %v165, 0.0
    %v169 = vld [vmem:[%s5] sm:$0x1]
    %v171 = vlaneseq
    %v172 = vshrl.u32 %v171, 7
    %v173 = vsub.s32 0, %v172
    %v174 = vrot.slane %v169, %v173
    %v177 = vsel %vm94, %v168, 0
    %179 = vmatprep.subr.mxu0 0.0
    %180 = vmatpush1.msra.mxu0 0.0
    %181 = vmatprep.subr.mxu0 0.0
    %182 = vmatpush1.msra.mxu0 0.0
    %183 = vmatprep.subr.mxu0 0.0
    %184 = vmatpush1.msra.mxu0 0.0
    %185 = vmatprep.subr.mxu0 0.0
    %186 = vmatpush1.msra.mxu0 0.0
    %187 = vmatprep.subr.mxu0 0.0
    %188 = vmatpush1.msra.mxu0 0.0
    %189 = vmatprep.subr.mxu0 0.0
    %190 = vmatpush1.msra.mxu0 0.0
    %191 = vmatprep.subr.mxu0 0.0
    %192 = vmatpush1.msra.mxu0 0.0
    %193 = vmatprep.subr.mxu0 0.0
    %194 = vmatpush1.msra.mxu0 0.0
    %195 = vmatprep.subr.mxu0 0.0
    %196 = vmatpush1.msra.mxu0 0.0
    %197 = vmatprep.subr.mxu0 0.0
    %198 = vmatpush1.msra.mxu0 0.0
    %199 = vmatprep.subr.mxu0 0.0
    %200 = vmatpush1.msra.mxu0 0.0
    %201 = vmatprep.subr.mxu0 0.0
    %202 = vmatpush1.msra.mxu0 0.0
    %203 = vmatprep.subr.mxu0 0.0
    %204 = vmatpush1.msra.mxu0 %v86
    %205 = vmatprep.subr.mxu0 0.0
    %206 = vmatpush1.msra.mxu0 %v85
    %207 = vmatprep.subr.mxu0 0.0
    %208 = vmatpush1.msra.mxu0 %v84
    %209 = vmatprep.subr.mxu0 0.0
    %210 = vmatpush1.msra.mxu0 %v83
    %211 = vmatprep.subr.mxu0 0.0
    %212 = vmatpush2.msra.mxu0 0.0
    %213 = vmatprep.subr.mxu0 0.0
    %214 = vmatpush2.msra.mxu0 0.0
    %215 = vmatprep.subr.mxu0 0.0
    %216 = vmatpush2.msra.mxu0 0.0
    %217 = vmatprep.subr.mxu0 0.0
    %218 = vmatpush2.msra.mxu0 0.0
    %219 = vmatprep.subr.mxu0 0.0
    %220 = vmatpush2.msra.mxu0 0.0
    %221 = vmatprep.subr.mxu0 0.0
    %222 = vmatpush2.msra.mxu0 0.0
    %223 = vmatprep.subr.mxu0 0.0
    %224 = vmatpush2.msra.mxu0 0.0
    %225 = vmatprep.subr.mxu0 0.0
    %226 = vmatpush2.msra.mxu0 0.0
    %227 = vmatprep.subr.mxu0 0.0
    %228 = vmatpush2.msra.mxu0 0.0
    %229 = vmatprep.subr.mxu0 0.0
    %230 = vmatpush2.msra.mxu0 0.0
    %231 = vmatprep.subr.mxu0 0.0
    %232 = vmatpush2.msra.mxu0 0.0
    %233 = vmatprep.subr.mxu0 0.0
    %234 = vmatpush2.msra.mxu0 0.0
    %235 = vmatprep.subr.mxu0 0.0
    %236 = vmatpush2.msra.mxu0 0.0
    %237 = vmatprep.subr.mxu0 0.0
    %238 = vmatpush2.msra.mxu0 0.0
    %239 = vmatprep.subr.mxu0 0.0
    %240 = vmatpush2.msra.mxu0 0.0
    %241 = vmatprep.subr.mxu0 0.0
    %242 = vmatpush2.msra.mxu0 0.0
    %243 = vmatprep.mubr.f32.mxu0 0.0
    %244 = vmatmul.mubr.f32.gmra.mxu0 %v177
    %v245 = vpop.f32.mrf.mxu0
    %v246 = vadd.f32 %v174, %v245
    %v247 = vpop.f32.mrf.mxu0
    %248 = vdwg.mxu0
    %249 = vst [vmem:[#allocation10] sm:$0xff] %v246
    %v250 = vld [vmem:[#allocation5] sm:$0xff]
    %v251 = vadd.f32 %v246, %v250
    %253 = vrot.lane.b32.xlu0 %v251, 96
    %v254 = vpop.permute.xlu0 %253
    %256 = vrot.lane.b32.xlu0 %v251, 64
    %v257 = vpop.permute.xlu0 %256
    %259 = vrot.lane.b32.xlu0 %v251, 32
    %v260 = vpop.permute.xlu0 %259
    %v262 = vcombine.low %v251, %v257
    %v263 = vcombine.high %v251, %v257
    %v265 = vunpack.c.l.s4 1983009808
    %v266 = vunpack.c.0.s8 %v265
    %v267 = vlaneseq
    %v268 = vshrl.u32 %v267, 7
    %v269 = vsub.s32 %v266, %v268
    %v270 = vrot.slane %v262, %v269
    %v272 = vunpack.c.l.s4 1983009808
    %v273 = vunpack.c.0.s8 %v272
    %v274 = vlaneseq
    %v275 = vshrl.u32 %v274, 7
    %v276 = vsub.s32 %v273, %v275
    %v277 = vrot.slane %v263, %v276
    %v278 = vcombine.low %v254, %v260
    %v279 = vcombine.high %v254, %v260
    %v281 = vunpack.c.l.s4 1983009808
    %v282 = vunpack.c.0.s8 %v281
    %v283 = vlaneseq
    %v284 = vshrl.u32 %v283, 7
    %v285 = vsub.s32 %v282, %v284
    %v286 = vrot.slane %v278, %v285
    %v288 = vunpack.c.l.s4 1983009808
    %v289 = vunpack.c.0.s8 %v288
    %v290 = vlaneseq
    %v291 = vshrl.u32 %v290, 7
    %v292 = vsub.s32 %v289, %v291
    %v293 = vrot.slane %v279, %v292
    %v294 = vcombine.low %v270, %v286
    %v295 = vcombine.high %v270, %v286
    %v297 = vunpack.c.l.s4 1934713408
    %v298 = vunpack.c.0.s8 %v297
    %v299 = vlaneseq
    %v300 = vshrl.u32 %v299, 7
    %v301 = vsub.s32 %v298, %v300
    %v302 = vrot.slane %v294, %v301
    %v304 = vunpack.c.l.s4 1934713408
    %v305 = vunpack.c.0.s8 %v304
    %v306 = vlaneseq
    %v307 = vshrl.u32 %v306, 7
    %v308 = vsub.s32 %v305, %v307
    %v309 = vrot.slane %v295, %v308
    %v310 = vcombine.low %v277, %v293
    %v311 = vcombine.high %v277, %v293
    %v313 = vunpack.c.l.s4 1934713408
    %v314 = vunpack.c.0.s8 %v313
    %v315 = vlaneseq
    %v316 = vshrl.u32 %v315, 7
    %v317 = vsub.s32 %v314, %v316
    %v318 = vrot.slane %v310, %v317
    %v320 = vunpack.c.l.s4 1934713408
    %v321 = vunpack.c.0.s8 %v320
    %v322 = vlaneseq
    %v323 = vshrl.u32 %v322, 7
    %v324 = vsub.s32 %v321, %v323
    %v325 = vrot.slane %v311, %v324
    %v326 = vcombine.high %v302, 0.0
    %v327 = vcombine.high %v309, 0.0
    %v328 = vcombine.high %v318, 0.0
    %v329 = vcombine.high %v325, 0.0
    %vm330 = vcmask 257024
    %v331 = vsel %vm330, %v302, -inf
    %332 = vmax.xlane.f32.xlu0 %v331
    %v333 = vpop.xlane.xlu0 %332
    %v334 = vsel %vm330, %v326, -inf
    %335 = vmax.xlane.f32.xlu0 %v334
    %v336 = vpop.xlane.xlu0 %335
    %v337 = vsel %vm330, %v309, -inf
    %338 = vmax.xlane.f32.xlu0 %v337
    %v339 = vpop.xlane.xlu0 %338
    %v340 = vsel %vm330, %v327, -inf
    %341 = vmax.xlane.f32.xlu0 %v340
    %v342 = vpop.xlane.xlu0 %341
    %v343 = vsel %vm330, %v318, -inf
    %344 = vmax.xlane.f32.xlu0 %v343
    %v345 = vpop.xlane.xlu0 %344
    %v346 = vsel %vm330, %v328, -inf
    %347 = vmax.xlane.f32.xlu0 %v346
    %v348 = vpop.xlane.xlu0 %347
    %v349 = vsel %vm330, %v325, -inf
    %350 = vmax.xlane.f32.xlu0 %v349
    %v351 = vpop.xlane.xlu0 %350
    %v352 = vsel %vm330, %v329, -inf
    %353 = vmax.xlane.f32.xlu0 %v352
    %v354 = vpop.xlane.xlu0 %353
    %v355 = vlaneseq
    %v356 = vand.u32 %v355, 127
    %vm357 = vcmp.ge.f32.partialorder %v302, %v333
    %vm358 = vcmp.ge.f32.partialorder %v326, %v336
    %vm359 = vcmp.ge.f32.partialorder %v309, %v339
    %vm360 = vcmp.ge.f32.partialorder %v327, %v342
    %vm361 = vcmp.ge.f32.partialorder %v318, %v345
    %vm362 = vcmp.ge.f32.partialorder %v328, %v348
    %vm363 = vcmp.ge.f32.partialorder %v325, %v351
    %vm364 = vcmp.ge.f32.partialorder %v329, %v354
    %v365 = vsel %vm357, %v356, 32
    %v366 = vsel %vm358, %v356, 32
    %v367 = vsel %vm359, %v356, 32
    %v368 = vsel %vm360, %v356, 32
    %v369 = vsel %vm361, %v356, 32
    %v370 = vsel %vm362, %v356, 32
    %v371 = vsel %vm363, %v356, 32
    %v372 = vsel %vm364, %v356, 32
    %v373 = vsel %vm330, %v365, 2147483647
    %v374 = vand.u32 %v373, 65535
    %v375 = vshra.s32 %v373, 16
    %v376 = vcvt.s32.f32 %v374
    %v377 = vcvt.s32.f32 %v375
    %378 = vmin.xlane.f32.xlu0 %v377
    %v379 = vpop.xlane.xlu0 %378
    %vm380 = vcmp.eq.f32.partialorder %v377, %v379
    %v381 = vsel %vm380, %v376, inf
    %382 = vmin.xlane.f32.xlu0 %v381
    %v383 = vpop.xlane.xlu0 %382
    %v384 = vcvt.f32.s32 %v383
    %v385 = vcvt.f32.s32 %v379
    %v386 = vshll.u32 %v385, 16
    %v387 = vadd.s32 %v386, %v384
    %v388 = vsel %vm330, %v366, 2147483647
    %v389 = vand.u32 %v388, 65535
    %v390 = vshra.s32 %v388, 16
    %v391 = vcvt.s32.f32 %v389
    %v392 = vcvt.s32.f32 %v390
    %393 = vmin.xlane.f32.xlu0 %v392
    %v394 = vpop.xlane.xlu0 %393
    %vm395 = vcmp.eq.f32.partialorder %v392, %v394
    %v396 = vsel %vm395, %v391, inf
    %397 = vmin.xlane.f32.xlu0 %v396
    %v398 = vpop.xlane.xlu0 %397
    %v399 = vcvt.f32.s32 %v398
    %v400 = vcvt.f32.s32 %v394
    %v401 = vshll.u32 %v400, 16
    %v402 = vadd.s32 %v401, %v399
    %v403 = vsel %vm330, %v367, 2147483647
    %v404 = vand.u32 %v403, 65535
    %v405 = vshra.s32 %v403, 16
    %v406 = vcvt.s32.f32 %v404
    %v407 = vcvt.s32.f32 %v405
    %408 = vmin.xlane.f32.xlu0 %v407
    %v409 = vpop.xlane.xlu0 %408
    %vm410 = vcmp.eq.f32.partialorder %v407, %v409
    %v411 = vsel %vm410, %v406, inf
    %412 = vmin.xlane.f32.xlu0 %v411
    %v413 = vpop.xlane.xlu0 %412
    %v414 = vcvt.f32.s32 %v413
    %v415 = vcvt.f32.s32 %v409
    %v416 = vshll.u32 %v415, 16
    %v417 = vadd.s32 %v416, %v414
    %v418 = vsel %vm330, %v368, 2147483647
    %v419 = vand.u32 %v418, 65535
    %v420 = vshra.s32 %v418, 16
    %v421 = vcvt.s32.f32 %v419
    %v422 = vcvt.s32.f32 %v420
    %423 = vmin.xlane.f32.xlu0 %v422
    %v424 = vpop.xlane.xlu0 %423
    %vm425 = vcmp.eq.f32.partialorder %v422, %v424
    %v426 = vsel %vm425, %v421, inf
    %427 = vmin.xlane.f32.xlu0 %v426
    %v428 = vpop.xlane.xlu0 %427
    %v429 = vcvt.f32.s32 %v428
    %v430 = vcvt.f32.s32 %v424
    %v431 = vshll.u32 %v430, 16
    %v432 = vadd.s32 %v431, %v429
    %v433 = vsel %vm330, %v369, 2147483647
    %v434 = vand.u32 %v433, 65535
    %v435 = vshra.s32 %v433, 16
    %v436 = vcvt.s32.f32 %v434
    %v437 = vcvt.s32.f32 %v435
    %438 = vmin.xlane.f32.xlu0 %v437
    %v439 = vpop.xlane.xlu0 %438
    %vm440 = vcmp.eq.f32.partialorder %v437, %v439
    %v441 = vsel %vm440, %v436, inf
    %442 = vmin.xlane.f32.xlu0 %v441
    %v443 = vpop.xlane.xlu0 %442
    %v444 = vcvt.f32.s32 %v443
    %v445 = vcvt.f32.s32 %v439
    %v446 = vshll.u32 %v445, 16
    %v447 = vadd.s32 %v446, %v444
    %v448 = vsel %vm330, %v370, 2147483647
    %v449 = vand.u32 %v448, 65535
    %v450 = vshra.s32 %v448, 16
    %v451 = vcvt.s32.f32 %v449
    %v452 = vcvt.s32.f32 %v450
    %453 = vmin.xlane.f32.xlu0 %v452
    %v454 = vpop.xlane.xlu0 %453
    %vm455 = vcmp.eq.f32.partialorder %v452, %v454
    %v456 = vsel %vm455, %v451, inf
    %457 = vmin.xlane.f32.xlu0 %v456
    %v458 = vpop.xlane.xlu0 %457
    %v459 = vcvt.f32.s32 %v458
    %v460 = vcvt.f32.s32 %v454
    %v461 = vshll.u32 %v460, 16
    %v462 = vadd.s32 %v461, %v459
    %v463 = vsel %vm330, %v371, 2147483647
    %v464 = vand.u32 %v463, 65535
    %v465 = vshra.s32 %v463, 16
    %v466 = vcvt.s32.f32 %v464
    %v467 = vcvt.s32.f32 %v465
    %468 = vmin.xlane.f32.xlu0 %v467
    %v469 = vpop.xlane.xlu0 %468
    %vm470 = vcmp.eq.f32.partialorder %v467, %v469
    %v471 = vsel %vm470, %v466, inf
    %472 = vmin.xlane.f32.xlu0 %v471
    %v473 = vpop.xlane.xlu0 %472
    %v474 = vcvt.f32.s32 %v473
    %v475 = vcvt.f32.s32 %v469
    %v476 = vshll.u32 %v475, 16
    %v477 = vadd.s32 %v476, %v474
    %v478 = vsel %vm330, %v372, 2147483647
    %v479 = vand.u32 %v478, 65535
    %v480 = vshra.s32 %v478, 16
    %v481 = vcvt.s32.f32 %v479
    %v482 = vcvt.s32.f32 %v480
    %483 = vmin.xlane.f32.xlu0 %v482
    %v484 = vpop.xlane.xlu0 %483
    %vm485 = vcmp.eq.f32.partialorder %v482, %v484
    %v486 = vsel %vm485, %v481, inf
    %487 = vmin.xlane.f32.xlu0 %v486
    %v488 = vpop.xlane.xlu0 %487
    %v489 = vcvt.f32.s32 %v488
    %v490 = vcvt.f32.s32 %v484
    %v491 = vshll.u32 %v490, 16
    %v492 = vadd.s32 %v491, %v489
    %vm493 = vcmp.eq.s32.totalorder %v356, %v387
    %vm494 = vcmp.eq.s32.totalorder %v356, %v402
    %vm495 = vcmp.eq.s32.totalorder %v356, %v417
    %vm496 = vcmp.eq.s32.totalorder %v356, %v432
    %vm497 = vcmp.eq.s32.totalorder %v356, %v447
    %vm498 = vcmp.eq.s32.totalorder %v356, %v462
    %vm499 = vcmp.eq.s32.totalorder %v356, %v477
    %vm500 = vcmp.eq.s32.totalorder %v356, %v492
    %v501 = vsel %vm493, 1, 0
    %v502 = vsel %vm494, 1, 0
    %v503 = vsel %vm495, 1, 0
    %v504 = vsel %vm496, 1, 0
    %v505 = vsel %vm497, 1, 0
    %v506 = vsel %vm498, 1, 0
    %v507 = vsel %vm499, 1, 0
    %v508 = vsel %vm500, 1, 0
    %v509 = vcvt.s32.f32 %v501
    %v510 = vcvt.s32.f32 %v502
    %v511 = vcvt.s32.f32 %v503
    %v512 = vcvt.s32.f32 %v504
    %v513 = vcvt.s32.f32 %v505
    %v514 = vcvt.s32.f32 %v506
    %v515 = vcvt.s32.f32 %v507
    %v516 = vcvt.s32.f32 %v508
    %v517 = vcombine.low %v509, %v511
    %v519 = vunpack.c.l.s4 1983009808
    %v520 = vunpack.c.0.s8 %v519
    %v521 = vlaneseq
    %v522 = vshrl.u32 %v521, 7
    %v523 = vsub.s32 %v520, %v522
    %v524 = vrot.slane %v517, %v523
    %v525 = vcombine.low %v510, %v512
    %v527 = vunpack.c.l.s4 1983009808
    %v528 = vunpack.c.0.s8 %v527
    %v529 = vlaneseq
    %v530 = vshrl.u32 %v529, 7
    %v531 = vsub.s32 %v528, %v530
    %v532 = vrot.slane %v525, %v531
    %v533 = vcombine.low %v513, %v515
    %v535 = vunpack.c.l.s4 1983009808
    %v536 = vunpack.c.0.s8 %v535
    %v537 = vlaneseq
    %v538 = vshrl.u32 %v537, 7
    %v539 = vsub.s32 %v536, %v538
    %v540 = vrot.slane %v533, %v539
    %v541 = vcombine.low %v514, %v516
    %v543 = vunpack.c.l.s4 1983009808
    %v544 = vunpack.c.0.s8 %v543
    %v545 = vlaneseq
    %v546 = vshrl.u32 %v545, 7
    %v547 = vsub.s32 %v544, %v546
    %v548 = vrot.slane %v541, %v547
    %v549 = vcombine.low %v524, %v532
    %v550 = vcombine.high %v524, %v532
    %v552 = vunpack.c.l.s4 1934713408
    %v553 = vunpack.c.0.s8 %v552
    %v554 = vlaneseq
    %v555 = vshrl.u32 %v554, 7
    %v556 = vsub.s32 %v553, %v555
    %v557 = vrot.slane %v549, %v556
    %v559 = vunpack.c.l.s4 1934713408
    %v560 = vunpack.c.0.s8 %v559
    %v561 = vlaneseq
    %v562 = vshrl.u32 %v561, 7
    %v563 = vsub.s32 %v560, %v562
    %v564 = vrot.slane %v550, %v563
    %v565 = vcombine.low %v540, %v548
    %v566 = vcombine.high %v540, %v548
    %v568 = vunpack.c.l.s4 1934713408
    %v569 = vunpack.c.0.s8 %v568
    %v570 = vlaneseq
    %v571 = vshrl.u32 %v570, 7
    %v572 = vsub.s32 %v569, %v571
    %v573 = vrot.slane %v565, %v572
    %v575 = vunpack.c.l.s4 1934713408
    %v576 = vunpack.c.0.s8 %v575
    %v577 = vlaneseq
    %v578 = vshrl.u32 %v577, 7
    %v579 = vsub.s32 %v576, %v578
    %v580 = vrot.slane %v566, %v579
    %v581 = vcombine.low %v557, %v573
    %v582 = vcombine.high %v557, %v573
    %v583 = vcombine.low %v564, %v580
    %v584 = vcombine.high %v564, %v580
    %586 = vrot.lane.b32.xlu0 %v582, 32
    %v587 = vpop.permute.xlu0 %586
    %590 = vrot.lane.b32.xlu0 %v583, 64
    %v591 = vpop.permute.xlu0 %590
    %594 = vrot.lane.b32.xlu0 %v584, 96
    %v595 = vpop.permute.xlu0 %594
    %v597 = vsel %vm94, %v581, %v587
    %vm598 = vcmask 523264
    %v599 = vsel %vm598, %v597, %v591
    %vm600 = vcmask 785408
    %v601 = vsel %vm600, %v599, %v595
    %602 = vst [vmem:[#allocation11] sm:$0xff] %v601
    // Predicated region
    $region42: #{tpu_custom_call.1} parent=1 // pred_check
      _
    $region43: #{tpu_custom_call.1} parent=1 // pred_check_branch
      %604 = sbr.rel (0) target = $region45
    $region44: #{tpu_custom_call.1} parent=1 // pred_region
      %s606 = ssub.s32 128, 128
      %607 = vsyncadd [#allocation4], %s606
      %s609 = sshll.u32 [#allocation10], 4
      %s610 = int_to_ptr.vmem [resolvable:$true] %s609
      %612 = dma.vmem_to_hbm [thread:$0]  %s610, 128, %s6, [#allocation4]
    $region45: #{tpu_custom_call.1} parent=1 // pred_fallthru
      _
    // Predicated region
    $region46: #{tpu_custom_call.1} parent=1 // pred_check
      _
    $region47: #{tpu_custom_call.1} parent=1 // pred_check_branch
      %614 = sbr.rel (0) target = $region49
    $region48: #{tpu_custom_call.1} parent=1 // pred_region
      %s616 = ssub.s32 128, 128
      %617 = vsyncadd [#allocation12], %s616
      %s619 = sshll.u32 [#allocation11], 4
      %s620 = int_to_ptr.vmem [resolvable:$true] %s619
      %622 = dma.vmem_to_hbm [thread:$0]  %s620, 128, %s7, [#allocation12]
    $region49: #{tpu_custom_call.1} parent=1 // pred_fallthru
      _
    // Predicated region
    $region50: #{tpu_custom_call.1} parent=1 // pred_check
      _
    $region51: #{tpu_custom_call.1} parent=1 // pred_check_branch
      %624 = sbr.rel (0) target = $region53
    $region52: #{tpu_custom_call.1} parent=1 // pred_region
      %625 = dma.done [#allocation4], 128
    $region53: #{tpu_custom_call.1} parent=1 // pred_fallthru
      _
    // Predicated region
    $region54: #{tpu_custom_call.1} parent=1 // pred_check
      _
    $region55: #{tpu_custom_call.1} parent=1 // pred_check_branch
      %627 = sbr.rel (0) target = $region57
    $region56: #{tpu_custom_call.1} parent=1 // pred_region
      %628 = dma.done [#allocation12], 128
    $region57: #{tpu_custom_call.1} parent=1 // pred_fallthru
      _
    %629 = vsyncpa [#allocation3], 1
    %630 = vsyncpa [#allocation6], 1
    %631 = vsyncpa [#allocation9], 1
    %632 = vsyncpa [#allocation4], 1
    %633 = vsyncpa [#allocation12], 1

</llo_original>
